<compile_context>
chip_gen: v6e
topology: v6e:2x2x1
jax: 0.10.0
libtpu: 0.0.40
codegen_flags: <defaults>
</compile_context>

<pallas_src>
import functools
import math

import jax
import jax.numpy as jnp
from jax.experimental import pallas as pl
from jax.experimental.pallas import tpu as pltpu


# ----------------------------------------------------------------------------
# Kernel
# ----------------------------------------------------------------------------
def _repeat_kernel(param_ref, out_ref):
    # param_ref: (1, block_d) in VMEM; out_ref: (block_b, block_d) in VMEM.
    # Sublane broadcast + (optional) cast + store; the kernel is purely
    # HBM-writeback bound, so no body micro-optimization is worthwhile.
    out_ref[...] = jnp.broadcast_to(param_ref[...], out_ref.shape).astype(out_ref.dtype)


# ----------------------------------------------------------------------------
# Tiling policy
# ----------------------------------------------------------------------------
# ~4 MiB per buffer -> 8 MiB for the double-buffered output tile.  Fits every
# generation's *default* scoped VMEM (v5e 16 MiB, v6e/v7x 32 MiB) with room
# for the (tiny) param input buffers and internal scratch.
_PER_BUFFER_BYTES = 4 * 1024 * 1024
# Above this output size, force at least 2 row tiles so the "parallel" grid
# axis can shard the writeback across v7x's two TensorCores.
_SPLIT_MIN_BYTES = 2 * 1024 * 1024


def _round_up(x: int, m: int) -> int:
    return -(-x // m) * m


def _choose_blocks(rows: int, width: int, itemsize: int, per_buffer_bytes: int):
    """Pick (block_b, block_d) for an output of shape (rows, width)."""
    # Sublane multiple for the output dtype: f32 -> 8, bf16 -> 16, 8-bit -> 32.
    row_multiple = {4: 8, 2: 16, 1: 32}.get(itemsize, 8)

    # Wide-D guard: even `row_multiple` rows of the full width blow the budget
    # -> also tile the lane axis (column blocks a multiple of 128) rather than
    # shrinking rows below the sublane multiple.
    if row_multiple * width * itemsize > per_buffer_bytes:
        block_d = max(128, (per_buffer_bytes // (row_multiple * itemsize) // 128) * 128)
        block_b = min(row_multiple, rows)
        return block_b, block_d

    block_d = width  # full extent: legal for any width, lane-dense if width % 128 == 0
    budget_rows = per_buffer_bytes // (width * itemsize)
    budget_rows = max(row_multiple, (budget_rows // row_multiple) * row_multiple)
    if rows > budget_rows:
        return budget_rows, block_d

    # Whole output fits in one tile.  If the writeback is big enough, still
    # split it in two so v7x's two TensorCores each take half.
    if rows * width * itemsize >= _SPLIT_MIN_BYTES and rows >= 2 * row_multiple:
        return _round_up(_round_up(rows, 2) // 2, row_multiple), block_d

    return rows, block_d  # single full-extent block (always legal)


# ----------------------------------------------------------------------------
# Wrapper
# ----------------------------------------------------------------------------
def parameter_forward_pallas(params_var: jax.Array, batch_size: int, *,
                             out_dtype=None,
                             per_buffer_bytes: int = _PER_BUFFER_BYTES) -> jax.Array:
    """Pallas path: materialize params_var.repeat(batch_size, 1)."""
    output_dim = params_var.shape[1]
    out_dtype = params_var.dtype if out_dtype is None else jnp.dtype(out_dtype)
    itemsize = out_dtype.itemsize

    # Lane-density packing: present the output as (B/k, k*D) with k*D a
    # multiple of 128 when possible (free, row-major-contiguous reshape back).
    rows, width = batch_size, output_dim
    param_slab = params_var
    packed = False
    if output_dim % 128 != 0:
        k = 128 // math.gcd(output_dim, 128)
        if batch_size >= k and batch_size % k == 0:
            rows, width = batch_size // k, k * output_dim
            param_slab = jnp.tile(params_var, (1, k))  # tiny (1, k*D) slab
            packed = True

    block_b, block_d = _choose_blocks(rows, width, itemsize, per_buffer_bytes)
    grid = (pl.cdiv(rows, block_b), pl.cdiv(width, block_d))

    out = pl.pallas_call(
        _repeat_kernel,
        out_shape=jax.ShapeDtypeStruct((rows, width), out_dtype),
        grid=grid,
        in_specs=[pl.BlockSpec((1, block_d), lambda i, j: (0, j))],
        out_specs=pl.BlockSpec((block_b, block_d), lambda i, j: (i, j)),
        compiler_params=pltpu.CompilerParams(
            # Both axes are independent; lets v7x shard writeback over 2 TCs.
            dimension_semantics=("parallel", "parallel"),
        ),
    )(param_slab)

    if packed:
        out = out.reshape(batch_size, output_dim)  # contiguous -> free reshape
    return out


@functools.partial(jax.jit, static_argnames=("materialize", "out_dtype"))
def parameter_forward(params_var: jax.Array, x: jax.Array,
                      materialize: bool = False, out_dtype=None) -> jax.Array:
    """Equivalent of Parameter.forward: params_var.repeat(batch_size, 1).

    materialize=False (default): fused XLA broadcast — zero HBM traffic when
    the consumer fuses it; no kernel can beat not materializing.
    materialize=True: Pallas kernel that writes the full (B, D) array to HBM
    (needed at framework boundaries, donation, collective inputs, ...).
    """
    batch_size = x.shape[0]
    output_dim = params_var.shape[1]
    if not materialize:
        out = jnp.broadcast_to(params_var, (batch_size, output_dim))
        return out if out_dtype is None else out.astype(out_dtype)
    return parameter_forward_pallas(params_var, batch_size, out_dtype=out_dtype)


class ParameterModule:
    """JAX mirror of the PyTorch Parameter module."""

    def __init__(self, input_dim: int, output_dim: int, init: float,
                 dtype=jnp.float32):
        self.output_dim = output_dim
        self.init = init
        self.dtype = dtype
        # np.zeros((1, output_dim)) + init, cast — deterministic.
        self.params_var = (jnp.zeros((1, output_dim), dtype=dtype)
                           + jnp.asarray(init, dtype=dtype))

    def __call__(self, x: jax.Array, materialize: bool = False,
                 out_dtype=None) -> jax.Array:
        return parameter_forward(self.params_var, x,
                                 materialize=materialize, out_dtype=out_dtype)

    def parameters(self):
        return [self.params_var]

    def reset_weights(self):
        self.params_var = jnp.full((1, self.output_dim), self.init, dtype=self.dtype)


if __name__ == "__main__":
    key = jax.random.PRNGKey(0)
    batch, channels, spatial, hidden = 2, 4, 16, 32

    # x: NCHW input; only its batch size matters to this module.
    x = jax.random.normal(key, (batch, channels, spatial, spatial), dtype=jnp.float32)

    module = ParameterModule(input_dim=channels * spatial * spatial,
                             output_dim=hidden, init=0.5)
    expected = jnp.broadcast_to(module.params_var, (batch, hidden))

    # --- 1) Pallas path on the demo shape (tiny, B < packing factor). -------
    out = jax.block_until_ready(module(x, materialize=True))
    assert out.shape == (batch, hidden), out.shape
    assert out.dtype == jnp.float32, out.dtype
    assert bool(jnp.allclose(out, expected)), "pallas path mismatch vs reference"

    # --- 2) Auto path: fused XLA broadcast (no materialization). ------------
    out_auto = jax.block_until_ready(module(x))
    assert out_auto.shape == (batch, hidden)
    assert bool(jnp.allclose(out_auto, expected)), "auto path mismatch vs reference"

    # --- 3) Lane-packed path: D=32 -> k=4, output produced as (B/4, 128). ---
    b3, d3 = 4096, 32
    m3 = ParameterModule(input_dim=1, output_dim=d3, init=-1.25)
    o3 = jax.block_until_ready(parameter_forward_pallas(m3.params_var, b3))
    assert o3.shape == (b3, d3), o3.shape
    assert bool(jnp.allclose(o3, jnp.broadcast_to(m3.params_var, (b3, d3)))), \
        "lane-packed path mismatch"

    # --- 4) Ragged tiled path: batch > row tile, partial final block. -------
    b4, d4 = 20490, 512
    m4 = ParameterModule(input_dim=1, output_dim=d4, init=0.75)
    o4 = jax.block_until_ready(parameter_forward_pallas(m4.params_var, b4))
    assert o4.shape == (b4, d4), o4.shape
    assert bool(jnp.allclose(o4, jnp.broadcast_to(m4.params_var, (b4, d4)))), \
        "ragged tiled path mismatch"

    # --- 5) bf16 output + forced 2-way row split (v7x dual-TC writeback). ---
    b5, d5 = 4096, 256
    m5 = ParameterModule(input_dim=1, output_dim=d5, init=0.3)
    o5 = jax.block_until_ready(
        parameter_forward_pallas(m5.params_var, b5, out_dtype=jnp.bfloat16))
    exp5 = jnp.broadcast_to(m5.params_var, (b5, d5)).astype(jnp.bfloat16)
    assert o5.shape == (b5, d5) and o5.dtype == jnp.bfloat16
    assert bool(jnp.allclose(o5.astype(jnp.float32), exp5.astype(jnp.float32))), \
        "bf16 path mismatch"

    # --- 6) Wide-D column tiling (exercised via a small VMEM budget). -------
    b6, d6 = 60, 4096
    m6 = ParameterModule(input_dim=1, output_dim=d6, init=2.5)
    o6 = jax.block_until_ready(
        parameter_forward_pallas(m6.params_var, b6, per_buffer_bytes=64 * 1024))
    assert o6.shape == (b6, d6), o6.shape
    assert bool(jnp.allclose(o6, jnp.broadcast_to(m6.params_var, (b6, d6)))), \
        "column-tiled path mismatch"

    print("KERNEL_OK")
</pallas_src>

<mosaic_0001>
module attributes {stable_mosaic.version = 11 : i64} {
  func.func @_repeat_kernel(%arg0: i32, %arg1: i32, %arg2: memref<1x32xf32, #tpu.memory_space<vmem>>, %arg3: memref<2x32xf32, #tpu.memory_space<vmem>>) attributes {dimension_semantics = [#tpu.dimension_semantics<parallel>, #tpu.dimension_semantics<parallel>], iteration_bounds = array<i64: 1, 1>, scalar_prefetch = 0 : i64, scratch_operands = 0 : i64, tpu.core_type = #tpu.core_type<tc>, window_params = [{transform_indices = @transform_0, window_bounds = array<i64: 1, 32>}, {transform_indices = @transform_1, window_bounds = array<i64: 2, 32>}]} {
    %c0 = arith.constant 0 : index
    %c0_0 = arith.constant 0 : index
    %0 = vector.load %arg2[%c0, %c0_0] : memref<1x32xf32, #tpu.memory_space<vmem>>, vector<1x32xf32>
    %1 = vector.shape_cast %0 : vector<1x32xf32> to vector<1x32xf32>
    %2 = vector.broadcast %1 : vector<1x32xf32> to vector<2x32xf32>
    %c0_1 = arith.constant 0 : index
    %c0_2 = arith.constant 0 : index
    %3 = vector.load %arg3[%c0_1, %c0_2] : memref<2x32xf32, #tpu.memory_space<vmem>>, vector<2x32xf32>
    tpu.vector_store %arg3[%c0_1, %c0_2], %2 {strides = array<i32>} : memref<2x32xf32, #tpu.memory_space<vmem>>, vector<2x32xf32>,
    return
  }
  func.func @transform_0(%arg0: i32, %arg1: i32) -> (i32, i32) {
    %c0_i32 = arith.constant 0 : i32
    %c0_i32_0 = arith.constant 0 : i32
    return %c0_i32, %arg1 : i32, i32
  }
  func.func @transform_1(%arg0: i32, %arg1: i32) -> (i32, i32) {
    %c0_i32 = arith.constant 0 : i32
    return %arg0, %arg1 : i32, i32
  }
}

</mosaic_0001>

<llo_original>
// kernel: parameter_forward.1
$region0: #{parameter_forward.1}
  #allocation0 [shape = 'u32[]', space=smem, size = 0x4, offset = 0x4, fixed_abs, tag = 'smem constant byte address 0x4 - core index']
  #allocation1 [shape = 'u32[144,128]{1,0:T(1,128)}', space=vmem, size = 0x12000, scoped, tag = 'internal scratch']
  %s0 = inlined_call_operand.hbm [shape: f32[1,32], index: 0, kind: input, shape index: {}]
  %s1 = inlined_call_operand.hbm [shape: f32[2,32], index: 1, kind: output, shape index: {}]
  %s2 = sld [smem:[#allocation0]]
  $region18: #{parameter_forward.1} parent=0
    _
  %s4 = ssub.s32 1, %s2
  %s5 = scalar_select 0, %s4, %s2
  $region1: #{parameter_forward.1} parent=0
    #allocation2 [shape = 'u8[512]{0}', space=vmem, size = 0x400, scoped, tag = 'input window, operand 0, single buffered']
    #allocation3 [shape = 's32[1]{0}', space=sflag, size = 0x4, scoped, tag = 'scoped memory for parameter_forward.1']
    #allocation4 [shape = 's32[1]{0}', space=sflag, size = 0x4, scoped, tag = 'scoped memory for parameter_forward.1']
    #allocation5 [shape = 'u8[1024]{0}', space=vmem, size = 0x400, scoped, tag = 'output window, operand 0, single buffered']
    %6 = vsyncpa [#allocation3], 0
    %7 = vsyncpa [#allocation4], 0
    // Predicated region
    $region2: #{parameter_forward.1} parent=1 // pred_check
      _
    $region3: #{parameter_forward.1} parent=1 // pred_check_branch
      %9 = sbr.rel (0) target = $region5
    $region4: #{parameter_forward.1} parent=1 // pred_region
      %s11 = ssub.s32 16, 16
      %12 = vsyncadd [#allocation3], %s11
      %s14 = sshll.u32 [#allocation2], 4
      %s15 = int_to_ptr.vmem [resolvable:$true] %s14
      %17 = dma.hbm_to_vmem [thread:$0]  %s0, 16, %s15, [#allocation3]
    $region5: #{parameter_forward.1} parent=1 // pred_fallthru
      _
    // Predicated region
    $region6: #{parameter_forward.1} parent=1 // pred_check
      _
    $region7: #{parameter_forward.1} parent=1 // pred_check_branch
      %19 = sbr.rel (0) target = $region9
    $region8: #{parameter_forward.1} parent=1 // pred_region
      %20 = dma.done [#allocation3], 16
    $region9: #{parameter_forward.1} parent=1 // pred_fallthru
      _
    %v21 = vld [vmem:[#allocation2] sm:$0x1]
    %v23 = vlaneseq
    %v24 = vshrl.u32 %v23, 7
    %v25 = vsub.s32 0, %v24
    %v26 = vrot.slane %v21, %v25
    %vm28 = vcmask 254976
    %29 = vst.msk [vmem:[#allocation5] sm:$0x3] %vm28, %v26
    // Predicated region
    $region10: #{parameter_forward.1} parent=1 // pred_check
      _
    $region11: #{parameter_forward.1} parent=1 // pred_check_branch
      %31 = sbr.rel (0) target = $region13
    $region12: #{parameter_forward.1} parent=1 // pred_region
      %s33 = ssub.s32 32, 32
      %34 = vsyncadd [#allocation4], %s33
      %s36 = sshll.u32 [#allocation5], 4
      %s37 = int_to_ptr.vmem [resolvable:$true] %s36
      %39 = dma.vmem_to_hbm [thread:$0]  %s37, 32, %s1, [#allocation4]
    $region13: #{parameter_forward.1} parent=1 // pred_fallthru
      _
    // Predicated region
    $region14: #{parameter_forward.1} parent=1 // pred_check
      _
    $region15: #{parameter_forward.1} parent=1 // pred_check_branch
      %41 = sbr.rel (0) target = $region17
    $region16: #{parameter_forward.1} parent=1 // pred_region
      %42 = dma.done [#allocation4], 32
    $region17: #{parameter_forward.1} parent=1 // pred_fallthru
      _
    %43 = vsyncpa [#allocation3], 1
    %44 = vsyncpa [#allocation4], 1

</llo_original>
